<compile_context>
chip_gen: v6e
topology: v6e:2x2x1
jax: 0.10.0
libtpu: 0.0.40
codegen_flags: <defaults>
</compile_context>

<pallas_src>
import functools

import jax
import jax.numpy as jnp
from jax.experimental import pallas as pl
from jax.experimental.pallas import tpu as pltpu


_ACT2FN = {
    "silu": jax.nn.silu,
    "swish": jax.nn.silu,
    "relu": jax.nn.relu,
    "gelu": functools.partial(jax.nn.gelu, approximate=False),
    "gelu_new": functools.partial(jax.nn.gelu, approximate=True),
    "gelu_pytorch_tanh": functools.partial(jax.nn.gelu, approximate=True),
    "tanh": jnp.tanh,
}

_HAS_BUFFERED = hasattr(pl, "Buffered")


def _patch_embedding_kernel(x_ref, whr_ref, bhr_ref, wo_ref, bo_ref, o_ref,
                            *, inter_size, act_fn, act_dtype):
    x = x_ref[...]                                                    # [tm, 2P] compute dtype
    # Fused [Wh | Wr] RHS: one MXU pass yields both the hidden pre-activation and
    # the residual projection (they share the same LHS). f32 accumulation + f32 bias.
    y = jnp.dot(x, whr_ref[...], preferred_element_type=jnp.float32) + bhr_ref[...]
    # On v6e/v7x the EUP supports bf16, so the activation runs in the compute dtype
    # (act_dtype == bf16 there); on v5e act_dtype stays f32 (no bf16 VPU/EUP).
    hid = act_fn(y[:, :inter_size].astype(act_dtype))                 # [tm, I]
    res = y[:, inter_size:]                                           # [tm, H]  f32
    out = jnp.dot(hid.astype(wo_ref.dtype), wo_ref[...],
                  preferred_element_type=jnp.float32) + bo_ref[...]   # [tm, H]  f32
    o_ref[...] = (out + res).astype(o_ref.dtype)


def prepare_sundial_patch_embedding_params(hidden_w, hidden_b, output_w, output_b,
                                           residual_w, residual_b,
                                           *, compute_dtype=jnp.bfloat16):
    """Transpose / fuse / cast the PyTorch-layout weights ONCE (not per forward call).

    PyTorch nn.Linear stores weight as [out, in]:
      hidden_w: [I, 2P], output_w: [H, I], residual_w: [H, 2P]
    Returns right-multiply layouts with hidden & residual fused along the output axis.
    """
    whr = jnp.concatenate([jnp.asarray(hidden_w).T, jnp.asarray(residual_w).T],
                          axis=1).astype(compute_dtype)                # [2P, I+H]
    bhr = jnp.concatenate([jnp.asarray(hidden_b), jnp.asarray(residual_b)]
                          )[None, :].astype(jnp.float32)               # [1, I+H]
    wo = jnp.asarray(output_w).T.astype(compute_dtype)                 # [I, H]
    bo = jnp.asarray(output_b)[None, :].astype(jnp.float32)            # [1, H]
    return {"whr": whr, "bhr": bhr, "wo": wo, "bo": bo,
            "inter_size": int(hidden_w.shape[0])}


@functools.lru_cache(maxsize=None)
def _chip_info():
    """(vmem_capacity_bytes, two_tensorcores, has_bf16_eup) — conservative fallbacks."""
    kind = ""
    try:
        kind = jax.devices()[0].device_kind.lower()
    except Exception:
        pass
    two_tc = ("v7" in kind) or ("7x" in kind)                # v7x: 2 TCs/chip, 64 MiB/TC
    old_gen = any(t in kind for t in ("v2", "v3", "v4", "v5"))
    has_bf16_eup = not old_gen                               # v6e / v7x (and unknown) -> bf16 ok
    vmem = None
    try:
        vmem = int(pltpu.get_tpu_info().vmem_capacity_bytes)
    except Exception:
        vmem = None
    if vmem is None or vmem <= 0:
        vmem = (64 << 20) if (two_tc or not kind) else (128 << 20)
    return vmem, two_tc, has_bf16_eup


def _row_granularity(compute_dtype):
    # bf16 packs 16 rows per vreg sublane group; f32 packs 8.
    return 16 if jnp.dtype(compute_dtype) == jnp.dtype(jnp.bfloat16) else 8


def _pick_tile_m(m_rows, *, two_tc, compute_dtype):
    """Large tiles to amortize the ~0.35 us/grid-step overhead and keep the MXU
    weight-stationary, but >= 2 tiles on v7x so both TensorCores get work."""
    gran = _row_granularity(compute_dtype)
    cap = 512 if two_tc else 1024            # v7x: 64 MiB/TC; v5e/v6e: 128 MiB VMEM
    min_tiles = 2 if two_tc else 1
    n_tiles = max(min_tiles, pl.cdiv(m_rows, cap))
    tm = pl.cdiv(m_rows, n_tiles)
    tm = ((tm + gran - 1) // gran) * gran
    return int(max(gran, min(tm, cap)))


def _make_pallas_call(*, grid_m, tile_m, f2, ih, inter_size, hidden,
                      compute_dtype, out_dtype, act_fn, act_dtype, vmem_cap_bytes):
    kernel = functools.partial(_patch_embedding_kernel,
                               inter_size=inter_size, act_fn=act_fn,
                               act_dtype=act_dtype)

    def _weight_spec(shape):
        # Grid-invariant operands: a single VMEM buffer is enough; default double
        # buffering would keep a second ~5 MB copy of every weight resident.
        if _HAS_BUFFERED:
            return pl.BlockSpec(shape, lambda i: (0, 0), pipeline_mode=pl.Buffered(1))
        return pl.BlockSpec(shape, lambda i: (0, 0))

    csize = jnp.dtype(compute_dtype).itemsize
    osize = jnp.dtype(out_dtype).itemsize
    asize = jnp.dtype(act_dtype).itemsize
    weight_bytes = (f2 * ih + inter_size * hidden) * csize + (ih + hidden) * 4

    # Per-tile VMEM estimate (no arbitrary 2x factor): pipelined input/output tiles,
    # resident single-buffered weights, and the f32/bf16 temporaries.
    est = (2 * tile_m * f2 * csize              # double-buffered input tile
           + weight_bytes                        # resident weights + biases
           + 2 * tile_m * hidden * osize         # double-buffered output tile
           + tile_m * ih * 4                     # y  (f32, [tm, I+H])
           + tile_m * inter_size * asize         # hid
           + 2 * tile_m * hidden * 4)            # out / res f32 temporaries
    # Generation-aware cap: ~100 MiB on 128 MiB chips (v5e/v6e), ~52 MiB on v7x.
    hw_cap = min(int(vmem_cap_bytes * 0.82), 100 << 20)
    vmem_limit = int(min(max(est + (8 << 20), 24 << 20), hw_cap))

    m_total = grid_m * tile_m
    cost = pl.CostEstimate(
        flops=2 * m_total * (f2 * ih + inter_size * hidden),
        transcendentals=m_total * inter_size,
        bytes_accessed=(m_total * f2 * csize + weight_bytes + m_total * hidden * osize),
    )

    return pl.pallas_call(
        kernel,
        out_shape=jax.ShapeDtypeStruct((m_total, hidden), out_dtype),
        grid_spec=pltpu.PrefetchScalarGridSpec(
            num_scalar_prefetch=0,
            grid=(grid_m,),
            in_specs=[
                pl.BlockSpec((tile_m, f2), lambda i: (i, 0)),   # feat row tile (pipelined)
                _weight_spec((f2, ih)),                          # [Wh | Wr]  resident
                _weight_spec((1, ih)),                           # [bh | br]  f32
                _weight_spec((inter_size, hidden)),              # Wo         resident
                _weight_spec((1, hidden)),                       # bo         f32
            ],
            out_specs=pl.BlockSpec((tile_m, hidden), lambda i: (i, 0)),
        ),
        compiler_params=pltpu.CompilerParams(
            dimension_semantics=("parallel",),   # independent row tiles (megacore-shardable)
            vmem_limit_bytes=vmem_limit,
        ),
        cost_estimate=cost,
    )


def sundial_patch_embedding(x, params, *, input_token_len, act="silu", tile_m=None):
    """x: [..., L] time series; params from prepare_sundial_patch_embedding_params."""
    whr, bhr, wo, bo = params["whr"], params["bhr"], params["wo"], params["bo"]
    inter_size = params["inter_size"]
    compute_dtype = whr.dtype
    hidden = wo.shape[1]
    ih = whr.shape[1]
    f2 = whr.shape[0]
    p = input_token_len
    assert f2 == 2 * p, "weights inconsistent with input_token_len"
    act_fn = _ACT2FN[act]
    out_dtype = x.dtype

    vmem_cap, two_tc, bf16_eup = _chip_info()
    # bf16 activation on chips with a bf16 EUP (v6e/v7x); f32 otherwise (v5e).
    act_dtype = compute_dtype if bf16_eup else jnp.float32

    # ---- patchify (pure layout; mirrors the PyTorch pad/unfold/cat) ----
    lead = x.shape[:-1]
    pad = (-x.shape[-1]) % p
    pad_cfg = [(0, 0)] * (x.ndim - 1) + [(pad, 0)]
    mask = jnp.ones_like(x)
    xp = jnp.pad(x, pad_cfg).reshape(*lead, -1, p)
    mp = jnp.pad(mask, pad_cfg).reshape(*lead, -1, p)
    # TODO(synk): the all-ones mask half of feat could be folded into bhr (with a
    # correction for the left-padded first patch) to halve feat HBM traffic; kept
    # explicit since the kernel is MXU/compute bound at real Sundial shapes.
    feat = jnp.concatenate([xp, mp], axis=-1)                  # [..., N, 2P]
    n_patches = feat.shape[-2]

    feat2d = feat.reshape(-1, f2).astype(compute_dtype)        # [M, 2P]
    m_rows = feat2d.shape[0]

    gran = _row_granularity(compute_dtype)
    if tile_m is None:
        tile_m = _pick_tile_m(m_rows, two_tc=two_tc, compute_dtype=compute_dtype)
    else:
        tile_m = max(gran, ((int(tile_m) + gran - 1) // gran) * gran)
    grid_m = pl.cdiv(m_rows, tile_m)
    m_pad = grid_m * tile_m
    if m_pad != m_rows:                                        # ragged M: pad rows, slice after
        feat2d = jnp.pad(feat2d, ((0, m_pad - m_rows), (0, 0)))

    call = _make_pallas_call(grid_m=grid_m, tile_m=tile_m, f2=f2, ih=ih,
                             inter_size=inter_size, hidden=hidden,
                             compute_dtype=compute_dtype, out_dtype=out_dtype,
                             act_fn=act_fn, act_dtype=act_dtype,
                             vmem_cap_bytes=vmem_cap)
    out2d = call(feat2d, whr, bhr, wo, bo)
    return out2d[:m_rows].reshape(*lead, n_patches, hidden)


def _reference_patch_embedding(x, hidden_w, hidden_b, output_w, output_b,
                               residual_w, residual_b, input_token_len, act="silu"):
    p = input_token_len
    pad = (-x.shape[-1]) % p
    pad_cfg = [(0, 0)] * (x.ndim - 1) + [(pad, 0)]
    mask = jnp.ones_like(x)
    xp = jnp.pad(x, pad_cfg).reshape(*x.shape[:-1], -1, p)
    mp = jnp.pad(mask, pad_cfg).reshape(*x.shape[:-1], -1, p)
    feat = jnp.concatenate([xp, mp], axis=-1)
    hid = _ACT2FN[act](feat @ hidden_w.T + hidden_b)
    out = hid @ output_w.T + output_b            # dropout = identity at inference
    res = feat @ residual_w.T + residual_b
    return out + res


if __name__ == "__main__":
    # Small shapes consistent with the module (real Sundial: P=16, I=3072, H=768).
    batch = 2
    seq_len = 37            # NOT a multiple of P -> exercises the left-padding path
    input_token_len = 16    # P; per-patch feature width = 2P = 32
    intermediate_size = 64
    hidden_size = 32
    f2 = 2 * input_token_len

    key = jax.random.PRNGKey(0)
    kx, kx2, k1, k2, k3, k4, k5, k6 = jax.random.split(key, 8)
    x = jax.random.normal(kx, (batch, seq_len), dtype=jnp.float32)
    hidden_w = jax.random.normal(k1, (intermediate_size, f2), jnp.float32) * 0.05
    hidden_b = jax.random.normal(k2, (intermediate_size,), jnp.float32) * 0.05
    output_w = jax.random.normal(k3, (hidden_size, intermediate_size), jnp.float32) * 0.05
    output_b = jax.random.normal(k4, (hidden_size,), jnp.float32) * 0.05
    residual_w = jax.random.normal(k5, (hidden_size, f2), jnp.float32) * 0.05
    residual_b = jax.random.normal(k6, (hidden_size,), jnp.float32) * 0.05

    ref = _reference_patch_embedding(x, hidden_w, hidden_b, output_w, output_b,
                                     residual_w, residual_b, input_token_len, act="silu")
    n_patches = -(-seq_len // input_token_len)

    # f32 compute path: tight correctness check against the pure-JAX reference.
    params_f32 = prepare_sundial_patch_embedding_params(
        hidden_w, hidden_b, output_w, output_b, residual_w, residual_b,
        compute_dtype=jnp.float32)
    out_f32 = jax.block_until_ready(
        sundial_patch_embedding(x, params_f32, input_token_len=input_token_len, act="silu"))
    assert out_f32.shape == (batch, n_patches, hidden_size), out_f32.shape
    assert jnp.allclose(out_f32, ref, atol=1e-4, rtol=1e-4), "f32 kernel mismatch vs reference"

    # Multi-tile + ragged-M path (forced small tile -> grid_m > 1, row padding).
    x2 = jax.random.normal(kx2, (3, 130), dtype=jnp.float32)       # 9 patches, M=27
    ref2 = _reference_patch_embedding(x2, hidden_w, hidden_b, output_w, output_b,
                                      residual_w, residual_b, input_token_len, act="silu")
    out2 = jax.block_until_ready(
        sundial_patch_embedding(x2, params_f32, input_token_len=input_token_len,
                                act="silu", tile_m=16))
    assert out2.shape == ref2.shape, (out2.shape, ref2.shape)
    assert jnp.allclose(out2, ref2, atol=1e-4, rtol=1e-4), "multi-tile kernel mismatch"

    # bf16 compute path (perf configuration: bf16 MXU + bf16 activation where the
    # chip supports it, f32 accumulation): loose check.
    params_bf16 = prepare_sundial_patch_embedding_params(
        hidden_w, hidden_b, output_w, output_b, residual_w, residual_b,
        compute_dtype=jnp.bfloat16)
    out_bf16 = jax.block_until_ready(
        sundial_patch_embedding(x, params_bf16, input_token_len=input_token_len, act="silu"))
    assert out_bf16.shape == (batch, n_patches, hidden_size)
    assert bool(jnp.all(jnp.isfinite(out_bf16)))
    assert jnp.allclose(out_bf16.astype(jnp.float32), ref, atol=5e-2, rtol=5e-2), \
        "bf16 kernel mismatch vs reference"

    print("KERNEL_OK")
</pallas_src>

<mosaic_0001>
module attributes {stable_mosaic.version = 11 : i64} {
  func.func @_patch_embedding_kernel(%arg0: i32, %arg1: memref<8x32xf32, #tpu.memory_space<vmem>>, %arg2: memref<32x96xf32, #tpu.memory_space<vmem>>, %arg3: memref<1x96xf32, #tpu.memory_space<vmem>>, %arg4: memref<64x32xf32, #tpu.memory_space<vmem>>, %arg5: memref<1x32xf32, #tpu.memory_space<vmem>>, %arg6: memref<8x32xf32, #tpu.memory_space<vmem>>) attributes {dimension_semantics = [#tpu.dimension_semantics<parallel>], iteration_bounds = array<i64: 1>, scalar_prefetch = 0 : i64, scratch_operands = 0 : i64, tpu.core_type = #tpu.core_type<tc>, window_params = [{transform_indices = @transform_0, window_bounds = array<i64: 8, 32>}, {pipeline_mode = #tpu.pipeline_mode<synchronous>, transform_indices = @transform_1, window_bounds = array<i64: 32, 96>}, {pipeline_mode = #tpu.pipeline_mode<synchronous>, transform_indices = @transform_2, window_bounds = array<i64: 1, 96>}, {pipeline_mode = #tpu.pipeline_mode<synchronous>, transform_indices = @transform_3, window_bounds = array<i64: 64, 32>}, {pipeline_mode = #tpu.pipeline_mode<synchronous>, transform_indices = @transform_4, window_bounds = array<i64: 1, 32>}, {transform_indices = @transform_5, window_bounds = array<i64: 8, 32>}]} {
    %c0 = arith.constant 0 : index
    %c0_0 = arith.constant 0 : index
    %0 = vector.load %arg1[%c0, %c0_0] : memref<8x32xf32, #tpu.memory_space<vmem>>, vector<8x32xf32>
    %c0_1 = arith.constant 0 : index
    %c0_2 = arith.constant 0 : index
    %1 = vector.load %arg2[%c0_1, %c0_2] : memref<32x96xf32, #tpu.memory_space<vmem>>, vector<32x96xf32>
    %cst = arith.constant dense<0.000000e+00> : vector<8x96xf32>
    %2 = tpu.matmul %0, %1, %cst {dimension_numbers = #tpu.dot_dimension_numbers<[1], [0], [0], [1], [0, 0, 1, 1], [], []>} : vector<8x32xf32>, vector<32x96xf32>, vector<8x96xf32> -> vector<8x96xf32>
    %c0_3 = arith.constant 0 : index
    %c0_4 = arith.constant 0 : index
    %3 = vector.load %arg3[%c0_3, %c0_4] : memref<1x96xf32, #tpu.memory_space<vmem>>, vector<1x96xf32>
    %4 = vector.broadcast %3 : vector<1x96xf32> to vector<8x96xf32>
    %5 = arith.addf %2, %4 : vector<8x96xf32>
    %6 = vector.extract_strided_slice %5 {offsets = [0, 0], sizes = [8, 64], strides = [1, 1]} : vector<8x96xf32> to vector<8x64xf32>
    %7 = arith.negf %6 : vector<8x64xf32>
    %8 = math.exp %7 : vector<8x64xf32>
    %cst_5 = arith.constant 1.000000e+00 : f32
    %9 = vector.broadcast %cst_5 : f32 to vector<8x64xf32>
    %10 = arith.addf %9, %8 : vector<8x64xf32>
    %11 = arith.divf %9, %10 : vector<8x64xf32>
    %12 = arith.mulf %6, %11 : vector<8x64xf32>
    %13 = vector.extract_strided_slice %5 {offsets = [0, 64], sizes = [8, 32], strides = [1, 1]} : vector<8x96xf32> to vector<8x32xf32>
    %c0_6 = arith.constant 0 : index
    %c0_7 = arith.constant 0 : index
    %14 = vector.load %arg4[%c0_6, %c0_7] : memref<64x32xf32, #tpu.memory_space<vmem>>, vector<64x32xf32>
    %cst_8 = arith.constant dense<0.000000e+00> : vector<8x32xf32>
    %15 = tpu.matmul %12, %14, %cst_8 {dimension_numbers = #tpu.dot_dimension_numbers<[1], [0], [0], [1], [0, 0, 1, 1], [], []>} : vector<8x64xf32>, vector<64x32xf32>, vector<8x32xf32> -> vector<8x32xf32>
    %c0_9 = arith.constant 0 : index
    %c0_10 = arith.constant 0 : index
    %16 = vector.load %arg5[%c0_9, %c0_10] : memref<1x32xf32, #tpu.memory_space<vmem>>, vector<1x32xf32>
    %17 = vector.broadcast %16 : vector<1x32xf32> to vector<8x32xf32>
    %18 = arith.addf %15, %17 : vector<8x32xf32>
    %19 = arith.addf %18, %13 : vector<8x32xf32>
    %c0_11 = arith.constant 0 : index
    %c0_12 = arith.constant 0 : index
    %20 = vector.load %arg6[%c0_11, %c0_12] : memref<8x32xf32, #tpu.memory_space<vmem>>, vector<8x32xf32>
    tpu.vector_store %arg6[%c0_11, %c0_12], %19 {strides = array<i32>} : memref<8x32xf32, #tpu.memory_space<vmem>>, vector<8x32xf32>,
    return
  }
  func.func @transform_0(%arg0: i32) -> (i32, i32) {
    %c0_i32 = arith.constant 0 : i32
    %c0_i32_0 = arith.constant 0 : i32
    return %arg0, %c0_i32 : i32, i32
  }
  func.func @transform_1(%arg0: i32) -> (i32, i32) {
    %c0_i32 = arith.constant 0 : i32
    %c0_i32_0 = arith.constant 0 : i32
    %c0_i32_1 = arith.constant 0 : i32
    return %c0_i32, %c0_i32_0 : i32, i32
  }
  func.func @transform_2(%arg0: i32) -> (i32, i32) {
    %c0_i32 = arith.constant 0 : i32
    %c0_i32_0 = arith.constant 0 : i32
    %c0_i32_1 = arith.constant 0 : i32
    return %c0_i32, %c0_i32_0 : i32, i32
  }
  func.func @transform_3(%arg0: i32) -> (i32, i32) {
    %c0_i32 = arith.constant 0 : i32
    %c0_i32_0 = arith.constant 0 : i32
    %c0_i32_1 = arith.constant 0 : i32
    return %c0_i32, %c0_i32_0 : i32, i32
  }
  func.func @transform_4(%arg0: i32) -> (i32, i32) {
    %c0_i32 = arith.constant 0 : i32
    %c0_i32_0 = arith.constant 0 : i32
    %c0_i32_1 = arith.constant 0 : i32
    return %c0_i32, %c0_i32_0 : i32, i32
  }
  func.func @transform_5(%arg0: i32) -> (i32, i32) {
    %c0_i32 = arith.constant 0 : i32
    %c0_i32_0 = arith.constant 0 : i32
    return %arg0, %c0_i32 : i32, i32
  }
}

</mosaic_0001>

<llo_original>
// kernel: tpu_custom_call.1
$region0: #{tpu_custom_call.1}
  #allocation0 [shape = 'u32[]', space=smem, size = 0x4, offset = 0x4, fixed_abs, tag = 'smem constant byte address 0x4 - core index']
  #allocation1 [shape = 'u32[144,128]{1,0:T(1,128)}', space=vmem, size = 0x12000, scoped, tag = 'internal scratch']
  %s0 = inlined_call_operand.vmem [shape: f32[8,32], index: 0, kind: input, shape index: {}]
  %s1 = inlined_call_operand.vmem [shape: f32[32,96], index: 1, kind: input, shape index: {}]
  %s2 = inlined_call_operand.vmem [shape: f32[1,96], index: 2, kind: input, shape index: {}]
  %s3 = inlined_call_operand.vmem [shape: f32[64,32], index: 3, kind: input, shape index: {}]
  %s4 = inlined_call_operand.vmem [shape: f32[1,32], index: 4, kind: input, shape index: {}]
  %s5 = inlined_call_operand.hbm [shape: f32[8,32], index: 5, kind: output, shape index: {}]
  %s6 = sld [smem:[#allocation0]]
  $region30: #{tpu_custom_call.1} parent=0
    _
  %s8 = ssub.s32 1, %s6
  %s9 = scalar_select 0, %s8, %s6
  $region1: #{tpu_custom_call.1} parent=0
    #allocation2 [shape = 'u8[4096]{0}', space=vmem, size = 0x1000, scoped, tag = 'output window, operand 0, single buffered']
    #allocation3 [shape = 's32[1]{0}', space=sflag, size = 0x4, scoped, tag = 'scoped memory for tpu_custom_call.1']
    %10 = vsyncpa [#allocation3], 0
    // Predicated region
    $region2: #{tpu_custom_call.1} parent=1 // pred_check
      _
    $region3: #{tpu_custom_call.1} parent=1 // pred_check_branch
      %12 = sbr.rel (0) target = $region5
    $region4: #{tpu_custom_call.1} parent=1 // pred_region
      _
    $region5: #{tpu_custom_call.1} parent=1 // pred_fallthru
      _
    // Predicated region
    $region6: #{tpu_custom_call.1} parent=1 // pred_check
      _
    $region7: #{tpu_custom_call.1} parent=1 // pred_check_branch
      %14 = sbr.rel (0) target = $region9
    $region8: #{tpu_custom_call.1} parent=1 // pred_region
      _
    $region9: #{tpu_custom_call.1} parent=1 // pred_fallthru
      _
    // Predicated region
    $region10: #{tpu_custom_call.1} parent=1 // pred_check
      _
    $region11: #{tpu_custom_call.1} parent=1 // pred_check_branch
      %16 = sbr.rel (0) target = $region13
    $region12: #{tpu_custom_call.1} parent=1 // pred_region
      _
    $region13: #{tpu_custom_call.1} parent=1 // pred_fallthru
      _
    // Predicated region
    $region14: #{tpu_custom_call.1} parent=1 // pred_check
      _
    $region15: #{tpu_custom_call.1} parent=1 // pred_check_branch
      %18 = sbr.rel (0) target = $region17
    $region16: #{tpu_custom_call.1} parent=1 // pred_region
      _
    $region17: #{tpu_custom_call.1} parent=1 // pred_fallthru
      _
    // Predicated region
    $region18: #{tpu_custom_call.1} parent=1 // pred_check
      _
    $region19: #{tpu_custom_call.1} parent=1 // pred_check_branch
      %20 = sbr.rel (0) target = $region21
    $region20: #{tpu_custom_call.1} parent=1 // pred_region
      _
    $region21: #{tpu_custom_call.1} parent=1 // pred_fallthru
      _
    %v21 = vld [vmem:[%s0] sm:$0xff]
    %v22 = vld [vmem:[%s1] sm:$0xff]
    %v23 = vld [vmem:[%s1 + $0x8] sm:$0xff]
    %v24 = vld [vmem:[%s1 + $0x10] sm:$0xff]
    %v25 = vld [vmem:[%s1 + $0x18] sm:$0xff]
    %v26 = vld [vmem:[%s2] sm:$0x1]
    %v28 = vlaneseq
    %v29 = vshrl.u32 %v28, 7
    %v30 = vsub.s32 0, %v29
    %v31 = vrot.slane %v26, %v30
    %vm33 = vcmask 261120
    %v35 = vsel %vm33, %v21, 0
    %37 = vmatprep.subr.mxu0 0.0
    %38 = vmatpush1.msra.mxu0 0.0
    %39 = vmatprep.subr.mxu0 0.0
    %40 = vmatpush1.msra.mxu0 0.0
    %41 = vmatprep.subr.mxu0 0.0
    %42 = vmatpush1.msra.mxu0 0.0
    %43 = vmatprep.subr.mxu0 0.0
    %44 = vmatpush1.msra.mxu0 0.0
    %45 = vmatprep.subr.mxu0 0.0
    %46 = vmatpush1.msra.mxu0 0.0
    %47 = vmatprep.subr.mxu0 0.0
    %48 = vmatpush1.msra.mxu0 0.0
    %49 = vmatprep.subr.mxu0 0.0
    %50 = vmatpush1.msra.mxu0 0.0
    %51 = vmatprep.subr.mxu0 0.0
    %52 = vmatpush1.msra.mxu0 0.0
    %53 = vmatprep.subr.mxu0 0.0
    %54 = vmatpush1.msra.mxu0 0.0
    %55 = vmatprep.subr.mxu0 0.0
    %56 = vmatpush1.msra.mxu0 0.0
    %57 = vmatprep.subr.mxu0 0.0
    %58 = vmatpush1.msra.mxu0 0.0
    %59 = vmatprep.subr.mxu0 0.0
    %60 = vmatpush1.msra.mxu0 0.0
    %61 = vmatprep.subr.mxu0 0.0
    %62 = vmatpush1.msra.mxu0 %v25
    %63 = vmatprep.subr.mxu0 0.0
    %64 = vmatpush1.msra.mxu0 %v24
    %65 = vmatprep.subr.mxu0 0.0
    %66 = vmatpush1.msra.mxu0 %v23
    %67 = vmatprep.subr.mxu0 0.0
    %68 = vmatpush1.msra.mxu0 %v22
    %69 = vmatprep.subr.mxu0 0.0
    %70 = vmatpush2.msra.mxu0 0.0
    %71 = vmatprep.subr.mxu0 0.0
    %72 = vmatpush2.msra.mxu0 0.0
    %73 = vmatprep.subr.mxu0 0.0
    %74 = vmatpush2.msra.mxu0 0.0
    %75 = vmatprep.subr.mxu0 0.0
    %76 = vmatpush2.msra.mxu0 0.0
    %77 = vmatprep.subr.mxu0 0.0
    %78 = vmatpush2.msra.mxu0 0.0
    %79 = vmatprep.subr.mxu0 0.0
    %80 = vmatpush2.msra.mxu0 0.0
    %81 = vmatprep.subr.mxu0 0.0
    %82 = vmatpush2.msra.mxu0 0.0
    %83 = vmatprep.subr.mxu0 0.0
    %84 = vmatpush2.msra.mxu0 0.0
    %85 = vmatprep.subr.mxu0 0.0
    %86 = vmatpush2.msra.mxu0 0.0
    %87 = vmatprep.subr.mxu0 0.0
    %88 = vmatpush2.msra.mxu0 0.0
    %89 = vmatprep.subr.mxu0 0.0
    %90 = vmatpush2.msra.mxu0 0.0
    %91 = vmatprep.subr.mxu0 0.0
    %92 = vmatpush2.msra.mxu0 0.0
    %93 = vmatprep.subr.mxu0 0.0
    %94 = vmatpush2.msra.mxu0 0.0
    %95 = vmatprep.subr.mxu0 0.0
    %96 = vmatpush2.msra.mxu0 0.0
    %97 = vmatprep.subr.mxu0 0.0
    %98 = vmatpush2.msra.mxu0 0.0
    %99 = vmatprep.subr.mxu0 0.0
    %100 = vmatpush2.msra.mxu0 0.0
    %101 = vmatprep.mubr.f32.mxu0 0.0
    %102 = vmatmul.mubr.f32.gmra.mxu0 %v35
    %v103 = vpop.f32.mrf.mxu0
    %v104 = vadd.f32 %v31, %v103
    %v105 = vpop.f32.mrf.mxu0
    %106 = vdwg.mxu0
    %v107 = vxor.u32 %v104, 2147483648
    %v108 = vmul.f32 %v107, 1.442695
    %v109 = vpow.pop %v108
    %v110 = vadd.f32 %v109, 1.0
    %v111 = vrcp.pop %v110
    %v112 = vmul.f32 1.0, %v111
    %v113 = vmul.f32 %v104, %v112
    %v114 = vld [vmem:[%s3] sm:$0xff]
    %v115 = vld [vmem:[%s3 + $0x8] sm:$0xff]
    %v116 = vld [vmem:[%s3 + $0x10] sm:$0xff]
    %v117 = vld [vmem:[%s3 + $0x18] sm:$0xff]
    %v118 = vld [vmem:[%s3 + $0x20] sm:$0xff]
    %v119 = vld [vmem:[%s3 + $0x28] sm:$0xff]
    %v120 = vld [vmem:[%s3 + $0x30] sm:$0xff]
    %v121 = vld [vmem:[%s3 + $0x38] sm:$0xff]
    %v122 = vld [vmem:[%s4] sm:$0x1]
    %v124 = vlaneseq
    %v125 = vshrl.u32 %v124, 7
    %v126 = vsub.s32 0, %v125
    %v127 = vrot.slane %v122, %v126
    %vm129 = vcmask 523264
    %v131 = vsel %vm129, %v113, 0
    %133 = vmatprep.subr.mxu0 0.0
    %134 = vmatpush1.msra.mxu0 0.0
    %135 = vmatprep.subr.mxu0 0.0
    %136 = vmatpush1.msra.mxu0 0.0
    %137 = vmatprep.subr.mxu0 0.0
    %138 = vmatpush1.msra.mxu0 0.0
    %139 = vmatprep.subr.mxu0 0.0
    %140 = vmatpush1.msra.mxu0 0.0
    %141 = vmatprep.subr.mxu0 0.0
    %142 = vmatpush1.msra.mxu0 0.0
    %143 = vmatprep.subr.mxu0 0.0
    %144 = vmatpush1.msra.mxu0 0.0
    %145 = vmatprep.subr.mxu0 0.0
    %146 = vmatpush1.msra.mxu0 0.0
    %147 = vmatprep.subr.mxu0 0.0
    %148 = vmatpush1.msra.mxu0 0.0
    %149 = vmatprep.subr.mxu0 0.0
    %150 = vmatpush1.msra.mxu0 %v121
    %151 = vmatprep.subr.mxu0 0.0
    %152 = vmatpush1.msra.mxu0 %v120
    %153 = vmatprep.subr.mxu0 0.0
    %154 = vmatpush1.msra.mxu0 %v119
    %155 = vmatprep.subr.mxu0 0.0
    %156 = vmatpush1.msra.mxu0 %v118
    %157 = vmatprep.subr.mxu0 0.0
    %158 = vmatpush1.msra.mxu0 %v117
    %159 = vmatprep.subr.mxu0 0.0
    %160 = vmatpush1.msra.mxu0 %v116
    %161 = vmatprep.subr.mxu0 0.0
    %162 = vmatpush1.msra.mxu0 %v115
    %163 = vmatprep.subr.mxu0 0.0
    %164 = vmatpush1.msra.mxu0 %v114
    %165 = vmatprep.subr.mxu0 0.0
    %166 = vmatpush2.msra.mxu0 0.0
    %167 = vmatprep.subr.mxu0 0.0
    %168 = vmatpush2.msra.mxu0 0.0
    %169 = vmatprep.subr.mxu0 0.0
    %170 = vmatpush2.msra.mxu0 0.0
    %171 = vmatprep.subr.mxu0 0.0
    %172 = vmatpush2.msra.mxu0 0.0
    %173 = vmatprep.subr.mxu0 0.0
    %174 = vmatpush2.msra.mxu0 0.0
    %175 = vmatprep.subr.mxu0 0.0
    %176 = vmatpush2.msra.mxu0 0.0
    %177 = vmatprep.subr.mxu0 0.0
    %178 = vmatpush2.msra.mxu0 0.0
    %179 = vmatprep.subr.mxu0 0.0
    %180 = vmatpush2.msra.mxu0 0.0
    %181 = vmatprep.subr.mxu0 0.0
    %182 = vmatpush2.msra.mxu0 0.0
    %183 = vmatprep.subr.mxu0 0.0
    %184 = vmatpush2.msra.mxu0 0.0
    %185 = vmatprep.subr.mxu0 0.0
    %186 = vmatpush2.msra.mxu0 0.0
    %187 = vmatprep.subr.mxu0 0.0
    %188 = vmatpush2.msra.mxu0 0.0
    %189 = vmatprep.subr.mxu0 0.0
    %190 = vmatpush2.msra.mxu0 0.0
    %191 = vmatprep.subr.mxu0 0.0
    %192 = vmatpush2.msra.mxu0 0.0
    %193 = vmatprep.subr.mxu0 0.0
    %194 = vmatpush2.msra.mxu0 0.0
    %195 = vmatprep.subr.mxu0 0.0
    %196 = vmatpush2.msra.mxu0 0.0
    %197 = vmatprep.mubr.f32.mxu0 0.0
    %198 = vmatmul.mubr.f32.gmra.mxu0 %v131
    %v199 = vpop.f32.mrf.mxu0
    %v200 = vadd.f32 %v127, %v199
    %v201 = vpop.f32.mrf.mxu0
    %202 = vdwg.mxu0
    %204 = vrot.lane.b32.xlu0 %v104, 64
    %v205 = vpop.permute.xlu0 %204
    %v207 = vadd.f32 %v200, %v205
    %208 = vst.msk [vmem:[#allocation2] sm:$0xff] %vm33, %v207
    // Predicated region
    $region22: #{tpu_custom_call.1} parent=1 // pred_check
      _
    $region23: #{tpu_custom_call.1} parent=1 // pred_check_branch
      %210 = sbr.rel (0) target = $region25
    $region24: #{tpu_custom_call.1} parent=1 // pred_region
      %s212 = ssub.s32 128, 128
      %213 = vsyncadd [#allocation3], %s212
      %s215 = sshll.u32 [#allocation2], 4
      %s216 = int_to_ptr.vmem [resolvable:$true] %s215
      %218 = dma.vmem_to_hbm [thread:$0]  %s216, 128, %s5, [#allocation3]
    $region25: #{tpu_custom_call.1} parent=1 // pred_fallthru
      _
    // Predicated region
    $region26: #{tpu_custom_call.1} parent=1 // pred_check
      _
    $region27: #{tpu_custom_call.1} parent=1 // pred_check_branch
      %220 = sbr.rel (0) target = $region29
    $region28: #{tpu_custom_call.1} parent=1 // pred_region
      %221 = dma.done [#allocation3], 128
    $region29: #{tpu_custom_call.1} parent=1 // pred_fallthru
      _
    %222 = vsyncpa [#allocation3], 1

</llo_original>
